<compile_context>
chip_gen: v6e
topology: v6e:2x2x1
jax: 0.10.0
libtpu: 0.0.40
codegen_flags: <defaults>
</compile_context>

<pallas_src>
import functools

import jax
import jax.numpy as jnp
from jax import lax
from jax.experimental import pallas as pl
from jax.experimental.pallas import tpu as pltpu

LANES = 128


def mlp_kernel(x_ref, w1_ref, b1_ref, w2_ref, b2_ref, o_ref, *, chunk_rows):
    # x_ref:  (F_in, TR, 128) VMEM  -- batch points, lane-dense
    # w1_ref: (F_in, H)       SMEM
    # b1_ref: (H,)            SMEM
    # w2_ref: (H, F_out)      SMEM
    # b2_ref: (F_out,)        SMEM
    # o_ref:  (F_out, TR, 128) VMEM
    F_in, H = w1_ref.shape
    _, F_out = w2_ref.shape
    tile_rows = x_ref.shape[1]
    n_chunks = tile_rows // chunk_rows

    # Hoisted output-bias splats (loop-invariant; avoids re-broadcasting per chunk).
    bias_out = [
        jnp.full((chunk_rows, LANES), b2_ref[k], jnp.float32) for k in range(F_out)
    ]

    def process_chunk(r):
        # Load the (chunk_rows, 128) slab for each of the 2 input features.
        xs = [x_ref[f, pl.ds(r, chunk_rows), :] for f in range(F_in)]
        # Output accumulators start from the layer-2 bias.
        accs = list(bias_out)
        # Interleave layer 1 and layer 2: each hidden unit is produced and
        # immediately folded into the 3 output accumulators, so it never
        # round-trips through VMEM.
        for j in range(H):
            h = xs[0] * w1_ref[0, j]
            for f in range(1, F_in):
                h = h + xs[f] * w1_ref[f, j]
            h = jnp.maximum(h + b1_ref[j], 0.0)
            for k in range(F_out):
                accs[k] = accs[k] + h * w2_ref[j, k]
        for k in range(F_out):
            o_ref[k, pl.ds(r, chunk_rows), :] = accs[k].astype(o_ref.dtype)

    if n_chunks == 1:
        # Single chunk: fully static indexing.
        process_chunk(0)
    else:
        def body(c, carry):
            process_chunk(pl.multiple_of(c * chunk_rows, chunk_rows))
            return carry

        lax.fori_loop(0, n_chunks, body, 0)


def spiral_double_layer(x, w1, b1, w2, b2, *, rows_per_tile=1024):
    """Forward pass of SpiralModelDoubleLayer.

    x:  (N, 2) float32
    w1: (2, 10)  (stored as in_features x out_features == PyTorch weight.T)
    b1: (10,)
    w2: (10, 3)
    b2: (3,)
    Returns (N, 3) float32.
    """
    N, F_in = x.shape
    F_out = w2.shape[1]

    # Number of 128-point rows needed; tile rows must be a multiple of 8.
    nr_needed = pl.cdiv(N, LANES)
    tr = max(8, min(rows_per_tile, ((nr_needed + 7) // 8) * 8))
    tr = (tr // 8) * 8
    nr = pl.cdiv(nr_needed, tr) * tr
    n_pad = nr * LANES

    # In-kernel row-chunk size: largest of {32, 16, 8} that divides the tile.
    if tr % 32 == 0:
        chunk_rows = 32
    elif tr % 16 == 0:
        chunk_rows = 16
    else:
        chunk_rows = 8

    # Feature-major, lane-dense layout: (N, 2) -> pad -> (2, NR, 128).
    x_fn = jnp.pad(x, ((0, n_pad - N), (0, 0))).T.reshape(F_in, nr, LANES)

    grid = (nr // tr,)
    # Deeper pipelining only pays off (and only allocates) with a long grid.
    stream_kwargs = dict(pipeline_mode=pl.Buffered(3)) if grid[0] >= 3 else {}

    x_spec = pl.BlockSpec((F_in, tr, LANES), lambda i: (0, i, 0), **stream_kwargs)
    o_spec = pl.BlockSpec((F_out, tr, LANES), lambda i: (0, i, 0), **stream_kwargs)
    smem_spec = pl.BlockSpec(memory_space=pltpu.MemorySpace.SMEM)

    out_fn = pl.pallas_call(
        functools.partial(mlp_kernel, chunk_rows=chunk_rows),
        out_shape=jax.ShapeDtypeStruct((F_out, nr, LANES), x.dtype),
        grid_spec=pltpu.PrefetchScalarGridSpec(
            num_scalar_prefetch=0,
            grid=grid,
            in_specs=[x_spec, smem_spec, smem_spec, smem_spec, smem_spec],
            out_specs=o_spec,
        ),
        compiler_params=pltpu.CompilerParams(
            dimension_semantics=("parallel",)),
    )(x_fn, w1, b1, w2, b2)

    # Back to (N, 3) row-major for the caller.
    return out_fn.reshape(F_out, n_pad)[:, :N].T


def init_params(key):
    """Deterministic init mimicking nn.Linear's U(-1/sqrt(fan_in), 1/sqrt(fan_in))."""
    k1, k2, k3, k4 = jax.random.split(key, 4)
    lim1 = 1.0 / jnp.sqrt(2.0)
    lim2 = 1.0 / jnp.sqrt(10.0)
    # Stored as (in, out) == PyTorch weight.T
    w1 = jax.random.uniform(k1, (2, 10), jnp.float32, -lim1, lim1)
    b1 = jax.random.uniform(k2, (10,), jnp.float32, -lim1, lim1)
    w2 = jax.random.uniform(k3, (10, 3), jnp.float32, -lim2, lim2)
    b2 = jax.random.uniform(k4, (3,), jnp.float32, -lim2, lim2)
    return w1, b1, w2, b2


if __name__ == "__main__":
    key = jax.random.PRNGKey(0)
    kx, kp = jax.random.split(key)
    w1, b1, w2, b2 = init_params(kp)

    def ref_forward(x):
        return jnp.maximum(x @ w1 + b1, 0.0) @ w2 + b2

    # Small batch of 2-D spiral points (single tile, single chunk; exercises
    # the fully-static indexing path and ragged-N padding).
    x_small = jax.random.normal(kx, (8, 2), jnp.float32)
    out_small = jax.block_until_ready(spiral_double_layer(x_small, w1, b1, w2, b2))
    assert out_small.shape == (8, 3)
    assert jnp.allclose(out_small, ref_forward(x_small), atol=1e-5, rtol=1e-5)

    # Ragged batch with a small tile so the multi-tile, multi-buffered pipeline
    # and the in-kernel chunk loop are exercised too (shapes still small).
    x_big = jax.random.normal(kx, (5000, 2), jnp.float32)
    out_big = jax.block_until_ready(
        spiral_double_layer(x_big, w1, b1, w2, b2, rows_per_tile=64))
    assert out_big.shape == (5000, 3)
    assert jnp.allclose(out_big, ref_forward(x_big), atol=1e-4, rtol=1e-4)

    print("KERNEL_OK")
</pallas_src>

<mosaic_0001>
module attributes {stable_mosaic.version = 11 : i64} {
  func.func @mlp_kernel(%arg0: i32, %arg1: memref<2x8x128xf32, #tpu.memory_space<vmem>>, %arg2: memref<2x10xf32, #tpu.memory_space<smem>>, %arg3: memref<10xf32, #tpu.memory_space<smem>>, %arg4: memref<10x3xf32, #tpu.memory_space<smem>>, %arg5: memref<3xf32, #tpu.memory_space<smem>>, %arg6: memref<3x8x128xf32, #tpu.memory_space<vmem>>) attributes {dimension_semantics = [#tpu.dimension_semantics<parallel>], iteration_bounds = array<i64: 1>, scalar_prefetch = 0 : i64, scratch_operands = 0 : i64, tpu.core_type = #tpu.core_type<tc>, window_params = [{transform_indices = @transform_0, window_bounds = array<i64: 2, 8, 128>}, {transform_indices = @transform_1, window_bounds = array<i64: 2, 10>}, {transform_indices = @transform_2, window_bounds = array<i64: 10>}, {transform_indices = @transform_3, window_bounds = array<i64: 10, 3>}, {transform_indices = @transform_4, window_bounds = array<i64: 3>}, {transform_indices = @transform_5, window_bounds = array<i64: 3, 8, 128>}]} {
    %c0 = arith.constant 0 : index
    %0 = memref.load %arg5[%c0] : memref<3xf32, #tpu.memory_space<smem>>
    %1 = vector.broadcast %0 : f32 to vector<8x128xf32>
    %c1 = arith.constant 1 : index
    %2 = memref.load %arg5[%c1] : memref<3xf32, #tpu.memory_space<smem>>
    %3 = vector.broadcast %2 : f32 to vector<8x128xf32>
    %c2 = arith.constant 2 : index
    %4 = memref.load %arg5[%c2] : memref<3xf32, #tpu.memory_space<smem>>
    %5 = vector.broadcast %4 : f32 to vector<8x128xf32>
    %c0_0 = arith.constant 0 : index
    %c0_1 = arith.constant 0 : index
    %c0_2 = arith.constant 0 : index
    %6 = vector.load %arg1[%c0_0, %c0_1, %c0_2] : memref<2x8x128xf32, #tpu.memory_space<vmem>>, vector<1x8x128xf32>
    %7 = vector.shape_cast %6 : vector<1x8x128xf32> to vector<8x128xf32>
    %c1_3 = arith.constant 1 : index
    %c0_4 = arith.constant 0 : index
    %c0_5 = arith.constant 0 : index
    %8 = vector.load %arg1[%c1_3, %c0_4, %c0_5] : memref<2x8x128xf32, #tpu.memory_space<vmem>>, vector<1x8x128xf32>
    %9 = vector.shape_cast %8 : vector<1x8x128xf32> to vector<8x128xf32>
    %c0_6 = arith.constant 0 : index
    %c0_7 = arith.constant 0 : index
    %10 = memref.load %arg2[%c0_6, %c0_7] : memref<2x10xf32, #tpu.memory_space<smem>>
    %11 = vector.broadcast %10 : f32 to vector<8x128xf32>
    %12 = arith.mulf %7, %11 : vector<8x128xf32>
    %c1_8 = arith.constant 1 : index
    %c0_9 = arith.constant 0 : index
    %13 = memref.load %arg2[%c1_8, %c0_9] : memref<2x10xf32, #tpu.memory_space<smem>>
    %14 = vector.broadcast %13 : f32 to vector<8x128xf32>
    %15 = arith.mulf %9, %14 : vector<8x128xf32>
    %16 = arith.addf %12, %15 : vector<8x128xf32>
    %c0_10 = arith.constant 0 : index
    %17 = memref.load %arg3[%c0_10] : memref<10xf32, #tpu.memory_space<smem>>
    %18 = vector.broadcast %17 : f32 to vector<8x128xf32>
    %19 = arith.addf %16, %18 : vector<8x128xf32>
    %cst = arith.constant 0.000000e+00 : f32
    %20 = vector.broadcast %cst : f32 to vector<8x128xf32>
    %21 = arith.maximumf %19, %20 : vector<8x128xf32>
    %c0_11 = arith.constant 0 : index
    %c0_12 = arith.constant 0 : index
    %22 = memref.load %arg4[%c0_11, %c0_12] : memref<10x3xf32, #tpu.memory_space<smem>>
    %23 = vector.broadcast %22 : f32 to vector<8x128xf32>
    %24 = arith.mulf %21, %23 : vector<8x128xf32>
    %25 = arith.addf %1, %24 : vector<8x128xf32>
    %c0_13 = arith.constant 0 : index
    %c1_14 = arith.constant 1 : index
    %26 = memref.load %arg4[%c0_13, %c1_14] : memref<10x3xf32, #tpu.memory_space<smem>>
    %27 = vector.broadcast %26 : f32 to vector<8x128xf32>
    %28 = arith.mulf %21, %27 : vector<8x128xf32>
    %29 = arith.addf %3, %28 : vector<8x128xf32>
    %c0_15 = arith.constant 0 : index
    %c2_16 = arith.constant 2 : index
    %30 = memref.load %arg4[%c0_15, %c2_16] : memref<10x3xf32, #tpu.memory_space<smem>>
    %31 = vector.broadcast %30 : f32 to vector<8x128xf32>
    %32 = arith.mulf %21, %31 : vector<8x128xf32>
    %33 = arith.addf %5, %32 : vector<8x128xf32>
    %c0_17 = arith.constant 0 : index
    %c1_18 = arith.constant 1 : index
    %34 = memref.load %arg2[%c0_17, %c1_18] : memref<2x10xf32, #tpu.memory_space<smem>>
    %35 = vector.broadcast %34 : f32 to vector<8x128xf32>
    %36 = arith.mulf %7, %35 : vector<8x128xf32>
    %c1_19 = arith.constant 1 : index
    %c1_20 = arith.constant 1 : index
    %37 = memref.load %arg2[%c1_19, %c1_20] : memref<2x10xf32, #tpu.memory_space<smem>>
    %38 = vector.broadcast %37 : f32 to vector<8x128xf32>
    %39 = arith.mulf %9, %38 : vector<8x128xf32>
    %40 = arith.addf %36, %39 : vector<8x128xf32>
    %c1_21 = arith.constant 1 : index
    %41 = memref.load %arg3[%c1_21] : memref<10xf32, #tpu.memory_space<smem>>
    %42 = vector.broadcast %41 : f32 to vector<8x128xf32>
    %43 = arith.addf %40, %42 : vector<8x128xf32>
    %cst_22 = arith.constant 0.000000e+00 : f32
    %44 = vector.broadcast %cst_22 : f32 to vector<8x128xf32>
    %45 = arith.maximumf %43, %44 : vector<8x128xf32>
    %c1_23 = arith.constant 1 : index
    %c0_24 = arith.constant 0 : index
    %46 = memref.load %arg4[%c1_23, %c0_24] : memref<10x3xf32, #tpu.memory_space<smem>>
    %47 = vector.broadcast %46 : f32 to vector<8x128xf32>
    %48 = arith.mulf %45, %47 : vector<8x128xf32>
    %49 = arith.addf %25, %48 : vector<8x128xf32>
    %c1_25 = arith.constant 1 : index
    %c1_26 = arith.constant 1 : index
    %50 = memref.load %arg4[%c1_25, %c1_26] : memref<10x3xf32, #tpu.memory_space<smem>>
    %51 = vector.broadcast %50 : f32 to vector<8x128xf32>
    %52 = arith.mulf %45, %51 : vector<8x128xf32>
    %53 = arith.addf %29, %52 : vector<8x128xf32>
    %c1_27 = arith.constant 1 : index
    %c2_28 = arith.constant 2 : index
    %54 = memref.load %arg4[%c1_27, %c2_28] : memref<10x3xf32, #tpu.memory_space<smem>>
    %55 = vector.broadcast %54 : f32 to vector<8x128xf32>
    %56 = arith.mulf %45, %55 : vector<8x128xf32>
    %57 = arith.addf %33, %56 : vector<8x128xf32>
    %c0_29 = arith.constant 0 : index
    %c2_30 = arith.constant 2 : index
    %58 = memref.load %arg2[%c0_29, %c2_30] : memref<2x10xf32, #tpu.memory_space<smem>>
    %59 = vector.broadcast %58 : f32 to vector<8x128xf32>
    %60 = arith.mulf %7, %59 : vector<8x128xf32>
    %c1_31 = arith.constant 1 : index
    %c2_32 = arith.constant 2 : index
    %61 = memref.load %arg2[%c1_31, %c2_32] : memref<2x10xf32, #tpu.memory_space<smem>>
    %62 = vector.broadcast %61 : f32 to vector<8x128xf32>
    %63 = arith.mulf %9, %62 : vector<8x128xf32>
    %64 = arith.addf %60, %63 : vector<8x128xf32>
    %c2_33 = arith.constant 2 : index
    %65 = memref.load %arg3[%c2_33] : memref<10xf32, #tpu.memory_space<smem>>
    %66 = vector.broadcast %65 : f32 to vector<8x128xf32>
    %67 = arith.addf %64, %66 : vector<8x128xf32>
    %cst_34 = arith.constant 0.000000e+00 : f32
    %68 = vector.broadcast %cst_34 : f32 to vector<8x128xf32>
    %69 = arith.maximumf %67, %68 : vector<8x128xf32>
    %c2_35 = arith.constant 2 : index
    %c0_36 = arith.constant 0 : index
    %70 = memref.load %arg4[%c2_35, %c0_36] : memref<10x3xf32, #tpu.memory_space<smem>>
    %71 = vector.broadcast %70 : f32 to vector<8x128xf32>
    %72 = arith.mulf %69, %71 : vector<8x128xf32>
    %73 = arith.addf %49, %72 : vector<8x128xf32>
    %c2_37 = arith.constant 2 : index
    %c1_38 = arith.constant 1 : index
    %74 = memref.load %arg4[%c2_37, %c1_38] : memref<10x3xf32, #tpu.memory_space<smem>>
    %75 = vector.broadcast %74 : f32 to vector<8x128xf32>
    %76 = arith.mulf %69, %75 : vector<8x128xf32>
    %77 = arith.addf %53, %76 : vector<8x128xf32>
    %c2_39 = arith.constant 2 : index
    %c2_40 = arith.constant 2 : index
    %78 = memref.load %arg4[%c2_39, %c2_40] : memref<10x3xf32, #tpu.memory_space<smem>>
    %79 = vector.broadcast %78 : f32 to vector<8x128xf32>
    %80 = arith.mulf %69, %79 : vector<8x128xf32>
    %81 = arith.addf %57, %80 : vector<8x128xf32>
    %c0_41 = arith.constant 0 : index
    %c3 = arith.constant 3 : index
    %82 = memref.load %arg2[%c0_41, %c3] : memref<2x10xf32, #tpu.memory_space<smem>>
    %83 = vector.broadcast %82 : f32 to vector<8x128xf32>
    %84 = arith.mulf %7, %83 : vector<8x128xf32>
    %c1_42 = arith.constant 1 : index
    %c3_43 = arith.constant 3 : index
    %85 = memref.load %arg2[%c1_42, %c3_43] : memref<2x10xf32, #tpu.memory_space<smem>>
    %86 = vector.broadcast %85 : f32 to vector<8x128xf32>
    %87 = arith.mulf %9, %86 : vector<8x128xf32>
    %88 = arith.addf %84, %87 : vector<8x128xf32>
    %c3_44 = arith.constant 3 : index
    %89 = memref.load %arg3[%c3_44] : memref<10xf32, #tpu.memory_space<smem>>
    %90 = vector.broadcast %89 : f32 to vector<8x128xf32>
    %91 = arith.addf %88, %90 : vector<8x128xf32>
    %cst_45 = arith.constant 0.000000e+00 : f32
    %92 = vector.broadcast %cst_45 : f32 to vector<8x128xf32>
    %93 = arith.maximumf %91, %92 : vector<8x128xf32>
    %c3_46 = arith.constant 3 : index
    %c0_47 = arith.constant 0 : index
    %94 = memref.load %arg4[%c3_46, %c0_47] : memref<10x3xf32, #tpu.memory_space<smem>>
    %95 = vector.broadcast %94 : f32 to vector<8x128xf32>
    %96 = arith.mulf %93, %95 : vector<8x128xf32>
    %97 = arith.addf %73, %96 : vector<8x128xf32>
    %c3_48 = arith.constant 3 : index
    %c1_49 = arith.constant 1 : index
    %98 = memref.load %arg4[%c3_48, %c1_49] : memref<10x3xf32, #tpu.memory_space<smem>>
    %99 = vector.broadcast %98 : f32 to vector<8x128xf32>
    %100 = arith.mulf %93, %99 : vector<8x128xf32>
    %101 = arith.addf %77, %100 : vector<8x128xf32>
    %c3_50 = arith.constant 3 : index
    %c2_51 = arith.constant 2 : index
    %102 = memref.load %arg4[%c3_50, %c2_51] : memref<10x3xf32, #tpu.memory_space<smem>>
    %103 = vector.broadcast %102 : f32 to vector<8x128xf32>
    %104 = arith.mulf %93, %103 : vector<8x128xf32>
    %105 = arith.addf %81, %104 : vector<8x128xf32>
    %c0_52 = arith.constant 0 : index
    %c4 = arith.constant 4 : index
    %106 = memref.load %arg2[%c0_52, %c4] : memref<2x10xf32, #tpu.memory_space<smem>>
    %107 = vector.broadcast %106 : f32 to vector<8x128xf32>
    %108 = arith.mulf %7, %107 : vector<8x128xf32>
    %c1_53 = arith.constant 1 : index
    %c4_54 = arith.constant 4 : index
    %109 = memref.load %arg2[%c1_53, %c4_54] : memref<2x10xf32, #tpu.memory_space<smem>>
    %110 = vector.broadcast %109 : f32 to vector<8x128xf32>
    %111 = arith.mulf %9, %110 : vector<8x128xf32>
    %112 = arith.addf %108, %111 : vector<8x128xf32>
    %c4_55 = arith.constant 4 : index
    %113 = memref.load %arg3[%c4_55] : memref<10xf32, #tpu.memory_space<smem>>
    %114 = vector.broadcast %113 : f32 to vector<8x128xf32>
    %115 = arith.addf %112, %114 : vector<8x128xf32>
    %cst_56 = arith.constant 0.000000e+00 : f32
    %116 = vector.broadcast %cst_56 : f32 to vector<8x128xf32>
    %117 = arith.maximumf %115, %116 : vector<8x128xf32>
    %c4_57 = arith.constant 4 : index
    %c0_58 = arith.constant 0 : index
    %118 = memref.load %arg4[%c4_57, %c0_58] : memref<10x3xf32, #tpu.memory_space<smem>>
    %119 = vector.broadcast %118 : f32 to vector<8x128xf32>
    %120 = arith.mulf %117, %119 : vector<8x128xf32>
    %121 = arith.addf %97, %120 : vector<8x128xf32>
    %c4_59 = arith.constant 4 : index
    %c1_60 = arith.constant 1 : index
    %122 = memref.load %arg4[%c4_59, %c1_60] : memref<10x3xf32, #tpu.memory_space<smem>>
    %123 = vector.broadcast %122 : f32 to vector<8x128xf32>
    %124 = arith.mulf %117, %123 : vector<8x128xf32>
    %125 = arith.addf %101, %124 : vector<8x128xf32>
    %c4_61 = arith.constant 4 : index
    %c2_62 = arith.constant 2 : index
    %126 = memref.load %arg4[%c4_61, %c2_62] : memref<10x3xf32, #tpu.memory_space<smem>>
    %127 = vector.broadcast %126 : f32 to vector<8x128xf32>
    %128 = arith.mulf %117, %127 : vector<8x128xf32>
    %129 = arith.addf %105, %128 : vector<8x128xf32>
    %c0_63 = arith.constant 0 : index
    %c5 = arith.constant 5 : index
    %130 = memref.load %arg2[%c0_63, %c5] : memref<2x10xf32, #tpu.memory_space<smem>>
    %131 = vector.broadcast %130 : f32 to vector<8x128xf32>
    %132 = arith.mulf %7, %131 : vector<8x128xf32>
    %c1_64 = arith.constant 1 : index
    %c5_65 = arith.constant 5 : index
    %133 = memref.load %arg2[%c1_64, %c5_65] : memref<2x10xf32, #tpu.memory_space<smem>>
    %134 = vector.broadcast %133 : f32 to vector<8x128xf32>
    %135 = arith.mulf %9, %134 : vector<8x128xf32>
    %136 = arith.addf %132, %135 : vector<8x128xf32>
    %c5_66 = arith.constant 5 : index
    %137 = memref.load %arg3[%c5_66] : memref<10xf32, #tpu.memory_space<smem>>
    %138 = vector.broadcast %137 : f32 to vector<8x128xf32>
    %139 = arith.addf %136, %138 : vector<8x128xf32>
    %cst_67 = arith.constant 0.000000e+00 : f32
    %140 = vector.broadcast %cst_67 : f32 to vector<8x128xf32>
    %141 = arith.maximumf %139, %140 : vector<8x128xf32>
    %c5_68 = arith.constant 5 : index
    %c0_69 = arith.constant 0 : index
    %142 = memref.load %arg4[%c5_68, %c0_69] : memref<10x3xf32, #tpu.memory_space<smem>>
    %143 = vector.broadcast %142 : f32 to vector<8x128xf32>
    %144 = arith.mulf %141, %143 : vector<8x128xf32>
    %145 = arith.addf %121, %144 : vector<8x128xf32>
    %c5_70 = arith.constant 5 : index
    %c1_71 = arith.constant 1 : index
    %146 = memref.load %arg4[%c5_70, %c1_71] : memref<10x3xf32, #tpu.memory_space<smem>>
    %147 = vector.broadcast %146 : f32 to vector<8x128xf32>
    %148 = arith.mulf %141, %147 : vector<8x128xf32>
    %149 = arith.addf %125, %148 : vector<8x128xf32>
    %c5_72 = arith.constant 5 : index
    %c2_73 = arith.constant 2 : index
    %150 = memref.load %arg4[%c5_72, %c2_73] : memref<10x3xf32, #tpu.memory_space<smem>>
    %151 = vector.broadcast %150 : f32 to vector<8x128xf32>
    %152 = arith.mulf %141, %151 : vector<8x128xf32>
    %153 = arith.addf %129, %152 : vector<8x128xf32>
    %c0_74 = arith.constant 0 : index
    %c6 = arith.constant 6 : index
    %154 = memref.load %arg2[%c0_74, %c6] : memref<2x10xf32, #tpu.memory_space<smem>>
    %155 = vector.broadcast %154 : f32 to vector<8x128xf32>
    %156 = arith.mulf %7, %155 : vector<8x128xf32>
    %c1_75 = arith.constant 1 : index
    %c6_76 = arith.constant 6 : index
    %157 = memref.load %arg2[%c1_75, %c6_76] : memref<2x10xf32, #tpu.memory_space<smem>>
    %158 = vector.broadcast %157 : f32 to vector<8x128xf32>
    %159 = arith.mulf %9, %158 : vector<8x128xf32>
    %160 = arith.addf %156, %159 : vector<8x128xf32>
    %c6_77 = arith.constant 6 : index
    %161 = memref.load %arg3[%c6_77] : memref<10xf32, #tpu.memory_space<smem>>
    %162 = vector.broadcast %161 : f32 to vector<8x128xf32>
    %163 = arith.addf %160, %162 : vector<8x128xf32>
    %cst_78 = arith.constant 0.000000e+00 : f32
    %164 = vector.broadcast %cst_78 : f32 to vector<8x128xf32>
    %165 = arith.maximumf %163, %164 : vector<8x128xf32>
    %c6_79 = arith.constant 6 : index
    %c0_80 = arith.constant 0 : index
    %166 = memref.load %arg4[%c6_79, %c0_80] : memref<10x3xf32, #tpu.memory_space<smem>>
    %167 = vector.broadcast %166 : f32 to vector<8x128xf32>
    %168 = arith.mulf %165, %167 : vector<8x128xf32>
    %169 = arith.addf %145, %168 : vector<8x128xf32>
    %c6_81 = arith.constant 6 : index
    %c1_82 = arith.constant 1 : index
    %170 = memref.load %arg4[%c6_81, %c1_82] : memref<10x3xf32, #tpu.memory_space<smem>>
    %171 = vector.broadcast %170 : f32 to vector<8x128xf32>
    %172 = arith.mulf %165, %171 : vector<8x128xf32>
    %173 = arith.addf %149, %172 : vector<8x128xf32>
    %c6_83 = arith.constant 6 : index
    %c2_84 = arith.constant 2 : index
    %174 = memref.load %arg4[%c6_83, %c2_84] : memref<10x3xf32, #tpu.memory_space<smem>>
    %175 = vector.broadcast %174 : f32 to vector<8x128xf32>
    %176 = arith.mulf %165, %175 : vector<8x128xf32>
    %177 = arith.addf %153, %176 : vector<8x128xf32>
    %c0_85 = arith.constant 0 : index
    %c7 = arith.constant 7 : index
    %178 = memref.load %arg2[%c0_85, %c7] : memref<2x10xf32, #tpu.memory_space<smem>>
    %179 = vector.broadcast %178 : f32 to vector<8x128xf32>
    %180 = arith.mulf %7, %179 : vector<8x128xf32>
    %c1_86 = arith.constant 1 : index
    %c7_87 = arith.constant 7 : index
    %181 = memref.load %arg2[%c1_86, %c7_87] : memref<2x10xf32, #tpu.memory_space<smem>>
    %182 = vector.broadcast %181 : f32 to vector<8x128xf32>
    %183 = arith.mulf %9, %182 : vector<8x128xf32>
    %184 = arith.addf %180, %183 : vector<8x128xf32>
    %c7_88 = arith.constant 7 : index
    %185 = memref.load %arg3[%c7_88] : memref<10xf32, #tpu.memory_space<smem>>
    %186 = vector.broadcast %185 : f32 to vector<8x128xf32>
    %187 = arith.addf %184, %186 : vector<8x128xf32>
    %cst_89 = arith.constant 0.000000e+00 : f32
    %188 = vector.broadcast %cst_89 : f32 to vector<8x128xf32>
    %189 = arith.maximumf %187, %188 : vector<8x128xf32>
    %c7_90 = arith.constant 7 : index
    %c0_91 = arith.constant 0 : index
    %190 = memref.load %arg4[%c7_90, %c0_91] : memref<10x3xf32, #tpu.memory_space<smem>>
    %191 = vector.broadcast %190 : f32 to vector<8x128xf32>
    %192 = arith.mulf %189, %191 : vector<8x128xf32>
    %193 = arith.addf %169, %192 : vector<8x128xf32>
    %c7_92 = arith.constant 7 : index
    %c1_93 = arith.constant 1 : index
    %194 = memref.load %arg4[%c7_92, %c1_93] : memref<10x3xf32, #tpu.memory_space<smem>>
    %195 = vector.broadcast %194 : f32 to vector<8x128xf32>
    %196 = arith.mulf %189, %195 : vector<8x128xf32>
    %197 = arith.addf %173, %196 : vector<8x128xf32>
    %c7_94 = arith.constant 7 : index
    %c2_95 = arith.constant 2 : index
    %198 = memref.load %arg4[%c7_94, %c2_95] : memref<10x3xf32, #tpu.memory_space<smem>>
    %199 = vector.broadcast %198 : f32 to vector<8x128xf32>
    %200 = arith.mulf %189, %199 : vector<8x128xf32>
    %201 = arith.addf %177, %200 : vector<8x128xf32>
    %c0_96 = arith.constant 0 : index
    %c8 = arith.constant 8 : index
    %202 = memref.load %arg2[%c0_96, %c8] : memref<2x10xf32, #tpu.memory_space<smem>>
    %203 = vector.broadcast %202 : f32 to vector<8x128xf32>
    %204 = arith.mulf %7, %203 : vector<8x128xf32>
    %c1_97 = arith.constant 1 : index
    %c8_98 = arith.constant 8 : index
    %205 = memref.load %arg2[%c1_97, %c8_98] : memref<2x10xf32, #tpu.memory_space<smem>>
    %206 = vector.broadcast %205 : f32 to vector<8x128xf32>
    %207 = arith.mulf %9, %206 : vector<8x128xf32>
    %208 = arith.addf %204, %207 : vector<8x128xf32>
    %c8_99 = arith.constant 8 : index
    %209 = memref.load %arg3[%c8_99] : memref<10xf32, #tpu.memory_space<smem>>
    %210 = vector.broadcast %209 : f32 to vector<8x128xf32>
    %211 = arith.addf %208, %210 : vector<8x128xf32>
    %cst_100 = arith.constant 0.000000e+00 : f32
    %212 = vector.broadcast %cst_100 : f32 to vector<8x128xf32>
    %213 = arith.maximumf %211, %212 : vector<8x128xf32>
    %c8_101 = arith.constant 8 : index
    %c0_102 = arith.constant 0 : index
    %214 = memref.load %arg4[%c8_101, %c0_102] : memref<10x3xf32, #tpu.memory_space<smem>>
    %215 = vector.broadcast %214 : f32 to vector<8x128xf32>
    %216 = arith.mulf %213, %215 : vector<8x128xf32>
    %217 = arith.addf %193, %216 : vector<8x128xf32>
    %c8_103 = arith.constant 8 : index
    %c1_104 = arith.constant 1 : index
    %218 = memref.load %arg4[%c8_103, %c1_104] : memref<10x3xf32, #tpu.memory_space<smem>>
    %219 = vector.broadcast %218 : f32 to vector<8x128xf32>
    %220 = arith.mulf %213, %219 : vector<8x128xf32>
    %221 = arith.addf %197, %220 : vector<8x128xf32>
    %c8_105 = arith.constant 8 : index
    %c2_106 = arith.constant 2 : index
    %222 = memref.load %arg4[%c8_105, %c2_106] : memref<10x3xf32, #tpu.memory_space<smem>>
    %223 = vector.broadcast %222 : f32 to vector<8x128xf32>
    %224 = arith.mulf %213, %223 : vector<8x128xf32>
    %225 = arith.addf %201, %224 : vector<8x128xf32>
    %c0_107 = arith.constant 0 : index
    %c9 = arith.constant 9 : index
    %226 = memref.load %arg2[%c0_107, %c9] : memref<2x10xf32, #tpu.memory_space<smem>>
    %227 = vector.broadcast %226 : f32 to vector<8x128xf32>
    %228 = arith.mulf %7, %227 : vector<8x128xf32>
    %c1_108 = arith.constant 1 : index
    %c9_109 = arith.constant 9 : index
    %229 = memref.load %arg2[%c1_108, %c9_109] : memref<2x10xf32, #tpu.memory_space<smem>>
    %230 = vector.broadcast %229 : f32 to vector<8x128xf32>
    %231 = arith.mulf %9, %230 : vector<8x128xf32>
    %232 = arith.addf %228, %231 : vector<8x128xf32>
    %c9_110 = arith.constant 9 : index
    %233 = memref.load %arg3[%c9_110] : memref<10xf32, #tpu.memory_space<smem>>
    %234 = vector.broadcast %233 : f32 to vector<8x128xf32>
    %235 = arith.addf %232, %234 : vector<8x128xf32>
    %cst_111 = arith.constant 0.000000e+00 : f32
    %236 = vector.broadcast %cst_111 : f32 to vector<8x128xf32>
    %237 = arith.maximumf %235, %236 : vector<8x128xf32>
    %c9_112 = arith.constant 9 : index
    %c0_113 = arith.constant 0 : index
    %238 = memref.load %arg4[%c9_112, %c0_113] : memref<10x3xf32, #tpu.memory_space<smem>>
    %239 = vector.broadcast %238 : f32 to vector<8x128xf32>
    %240 = arith.mulf %237, %239 : vector<8x128xf32>
    %241 = arith.addf %217, %240 : vector<8x128xf32>
    %c9_114 = arith.constant 9 : index
    %c1_115 = arith.constant 1 : index
    %242 = memref.load %arg4[%c9_114, %c1_115] : memref<10x3xf32, #tpu.memory_space<smem>>
    %243 = vector.broadcast %242 : f32 to vector<8x128xf32>
    %244 = arith.mulf %237, %243 : vector<8x128xf32>
    %245 = arith.addf %221, %244 : vector<8x128xf32>
    %c9_116 = arith.constant 9 : index
    %c2_117 = arith.constant 2 : index
    %246 = memref.load %arg4[%c9_116, %c2_117] : memref<10x3xf32, #tpu.memory_space<smem>>
    %247 = vector.broadcast %246 : f32 to vector<8x128xf32>
    %248 = arith.mulf %237, %247 : vector<8x128xf32>
    %249 = arith.addf %225, %248 : vector<8x128xf32>
    %c0_118 = arith.constant 0 : index
    %c0_119 = arith.constant 0 : index
    %c0_120 = arith.constant 0 : index
    %250 = vector.load %arg6[%c0_118, %c0_119, %c0_120] : memref<3x8x128xf32, #tpu.memory_space<vmem>>, vector<1x8x128xf32>
    %251 = vector.shape_cast %250 : vector<1x8x128xf32> to vector<8x128xf32>
    %252 = vector.shape_cast %241 : vector<8x128xf32> to vector<1x8x128xf32>
    tpu.vector_store %arg6[%c0_118, %c0_119, %c0_120], %252 {strides = array<i32>} : memref<3x8x128xf32, #tpu.memory_space<vmem>>, vector<1x8x128xf32>,
    %c1_121 = arith.constant 1 : index
    %c0_122 = arith.constant 0 : index
    %c0_123 = arith.constant 0 : index
    %253 = vector.load %arg6[%c1_121, %c0_122, %c0_123] : memref<3x8x128xf32, #tpu.memory_space<vmem>>, vector<1x8x128xf32>
    %254 = vector.shape_cast %253 : vector<1x8x128xf32> to vector<8x128xf32>
    %255 = vector.shape_cast %245 : vector<8x128xf32> to vector<1x8x128xf32>
    tpu.vector_store %arg6[%c1_121, %c0_122, %c0_123], %255 {strides = array<i32>} : memref<3x8x128xf32, #tpu.memory_space<vmem>>, vector<1x8x128xf32>,
    %c2_124 = arith.constant 2 : index
    %c0_125 = arith.constant 0 : index
    %c0_126 = arith.constant 0 : index
    %256 = vector.load %arg6[%c2_124, %c0_125, %c0_126] : memref<3x8x128xf32, #tpu.memory_space<vmem>>, vector<1x8x128xf32>
    %257 = vector.shape_cast %256 : vector<1x8x128xf32> to vector<8x128xf32>
    %258 = vector.shape_cast %249 : vector<8x128xf32> to vector<1x8x128xf32>
    tpu.vector_store %arg6[%c2_124, %c0_125, %c0_126], %258 {strides = array<i32>} : memref<3x8x128xf32, #tpu.memory_space<vmem>>, vector<1x8x128xf32>,
    return
  }
  func.func @transform_0(%arg0: i32) -> (i32, i32, i32) {
    %c0_i32 = arith.constant 0 : i32
    %c0_i32_0 = arith.constant 0 : i32
    %c0_i32_1 = arith.constant 0 : i32
    return %c0_i32, %arg0, %c0_i32_0 : i32, i32, i32
  }
  func.func @transform_1(%arg0: i32) -> (i32, i32) {
    %c0_i32 = arith.constant 0 : i32
    %c0_i32_0 = arith.constant 0 : i32
    %c0_i32_1 = arith.constant 0 : i32
    return %c0_i32, %c0_i32_0 : i32, i32
  }
  func.func @transform_2(%arg0: i32) -> i32 {
    %c0_i32 = arith.constant 0 : i32
    %c0_i32_0 = arith.constant 0 : i32
    return %c0_i32 : i32
  }
  func.func @transform_3(%arg0: i32) -> (i32, i32) {
    %c0_i32 = arith.constant 0 : i32
    %c0_i32_0 = arith.constant 0 : i32
    %c0_i32_1 = arith.constant 0 : i32
    return %c0_i32, %c0_i32_0 : i32, i32
  }
  func.func @transform_4(%arg0: i32) -> i32 {
    %c0_i32 = arith.constant 0 : i32
    %c0_i32_0 = arith.constant 0 : i32
    return %c0_i32 : i32
  }
  func.func @transform_5(%arg0: i32) -> (i32, i32, i32) {
    %c0_i32 = arith.constant 0 : i32
    %c0_i32_0 = arith.constant 0 : i32
    %c0_i32_1 = arith.constant 0 : i32
    return %c0_i32, %arg0, %c0_i32_0 : i32, i32, i32
  }
}

</mosaic_0001>

<llo_original>
// kernel: tpu_custom_call.1
$region0: #{tpu_custom_call.1}
  #allocation0 [shape = 'u32[]', space=smem, size = 0x4, offset = 0x4, fixed_abs, tag = 'smem constant byte address 0x4 - core index']
  #allocation1 [shape = 'u32[144,128]{1,0:T(1,128)}', space=vmem, size = 0x12000, scoped, tag = 'internal scratch']
  %s0 = inlined_call_operand.vmem [shape: f32[2,8,128], index: 0, kind: input, shape index: {}]
  %s1 = inlined_call_operand.vmem [shape: f32[2,10], index: 1, kind: input, shape index: {}]
  %s2 = inlined_call_operand.vmem [shape: f32[10], index: 2, kind: input, shape index: {}]
  %s3 = inlined_call_operand.vmem [shape: f32[10,3], index: 3, kind: input, shape index: {}]
  %s4 = inlined_call_operand.vmem [shape: f32[3], index: 4, kind: input, shape index: {}]
  %s5 = inlined_call_operand.hbm [shape: f32[3,8,128], index: 5, kind: output, shape index: {}]
  %s6 = sld [smem:[#allocation0]]
  $region46: #{tpu_custom_call.1} parent=0
    _
  %s8 = ssub.s32 1, %s6
  %s9 = scalar_select 0, %s8, %s6
  $region1: #{tpu_custom_call.1} parent=0
    #allocation2 [shape = 'u8[1024]{0}', space=smem, size = 0x400, scoped, tag = 'input window, operand 1, single buffered']
    #allocation3 [shape = 's32[1]{0}', space=sflag, size = 0x4, scoped, tag = 'scoped memory for tpu_custom_call.1']
    #allocation4 [shape = 's32[1]{0}', space=sflag, size = 0x4, scoped, tag = 'scoped memory for tpu_custom_call.1']
    #allocation5 [shape = 'u8[512]{0}', space=smem, size = 0x200, scoped, tag = 'input window, operand 2, single buffered']
    #allocation6 [shape = 's32[1]{0}', space=sflag, size = 0x4, scoped, tag = 'scoped memory for tpu_custom_call.1']
    #allocation7 [shape = 'u8[8192]{0}', space=smem, size = 0x2000, scoped, tag = 'input window, operand 3, single buffered']
    #allocation8 [shape = 'u8[512]{0}', space=smem, size = 0x200, scoped, tag = 'input window, operand 4, single buffered']
    #allocation9 [shape = 's32[1]{0}', space=sflag, size = 0x4, scoped, tag = 'scoped memory for tpu_custom_call.1']
    #allocation10 [shape = 'u8[12288]{0}', space=vmem, size = 0x3000, scoped, tag = 'output window, operand 0, single buffered']
    %10 = vsyncpa [#allocation4], 0
    %11 = vsyncpa [#allocation6], 0
    %12 = vsyncpa [#allocation9], 0
    %13 = vsyncpa [#allocation3], 0
    // Predicated region
    $region2: #{tpu_custom_call.1} parent=1 // pred_check
      _
    $region3: #{tpu_custom_call.1} parent=1 // pred_check_branch
      %15 = sbr.rel (0) target = $region5
    $region4: #{tpu_custom_call.1} parent=1 // pred_region
      _
    $region5: #{tpu_custom_call.1} parent=1 // pred_fallthru
      _
    // Predicated region
    $region6: #{tpu_custom_call.1} parent=1 // pred_check
      _
    $region7: #{tpu_custom_call.1} parent=1 // pred_check_branch
      %17 = sbr.rel (0) target = $region9
    $region8: #{tpu_custom_call.1} parent=1 // pred_region
      %s19 = ssub.s32 32, 32
      %20 = vsyncadd [#allocation4], %s19
      %s22 = sshll.u32 %s1, 4
      %s23 = int_to_ptr.vmem [resolvable:$true] %s22
      %25 = dma.vmem_to_smem %s23, 32, [#allocation2], [#allocation4]
    $region9: #{tpu_custom_call.1} parent=1 // pred_fallthru
      _
    // Predicated region
    $region10: #{tpu_custom_call.1} parent=1 // pred_check
      _
    $region11: #{tpu_custom_call.1} parent=1 // pred_check_branch
      %27 = sbr.rel (0) target = $region13
    $region12: #{tpu_custom_call.1} parent=1 // pred_region
      %s29 = ssub.s32 16, 16
      %30 = vsyncadd [#allocation6], %s29
      %s32 = sshll.u32 %s2, 4
      %s33 = int_to_ptr.vmem [resolvable:$true] %s32
      %35 = dma.vmem_to_smem %s33, 16, [#allocation5], [#allocation6]
    $region13: #{tpu_custom_call.1} parent=1 // pred_fallthru
      _
    // Predicated region
    $region14: #{tpu_custom_call.1} parent=1 // pred_check
      _
    $region15: #{tpu_custom_call.1} parent=1 // pred_check_branch
      %37 = sbr.rel (0) target = $region17
    $region16: #{tpu_custom_call.1} parent=1 // pred_region
      %s39 = ssub.s32 256, 256
      %40 = vsyncadd [#allocation6], %s39
      %s41 = sshll.u32 %s3, 4
      %s42 = int_to_ptr.vmem [resolvable:$true] %s41
      %47 = dma.vmem_to_smem %s42, 256, [#allocation7], [#allocation6], 128, 128, 8
    $region17: #{tpu_custom_call.1} parent=1 // pred_fallthru
      _
    // Predicated region
    $region18: #{tpu_custom_call.1} parent=1 // pred_check
      _
    $region19: #{tpu_custom_call.1} parent=1 // pred_check_branch
      %49 = sbr.rel (0) target = $region21
    $region20: #{tpu_custom_call.1} parent=1 // pred_region
      %s51 = ssub.s32 16, 16
      %52 = vsyncadd [#allocation9], %s51
      %s54 = sshll.u32 %s4, 4
      %s55 = int_to_ptr.vmem [resolvable:$true] %s54
      %57 = dma.vmem_to_smem %s55, 16, [#allocation8], [#allocation9]
    $region21: #{tpu_custom_call.1} parent=1 // pred_fallthru
      _
    // Predicated region
    $region22: #{tpu_custom_call.1} parent=1 // pred_check
      _
    $region23: #{tpu_custom_call.1} parent=1 // pred_check_branch
      %59 = sbr.rel (0) target = $region25
    $region24: #{tpu_custom_call.1} parent=1 // pred_region
      %60 = dma.done [#allocation4], 32
    $region25: #{tpu_custom_call.1} parent=1 // pred_fallthru
      _
    // Predicated region
    $region26: #{tpu_custom_call.1} parent=1 // pred_check
      _
    $region27: #{tpu_custom_call.1} parent=1 // pred_check_branch
      %62 = sbr.rel (0) target = $region29
    $region28: #{tpu_custom_call.1} parent=1 // pred_region
      %63 = dma.done [#allocation6], 16
    $region29: #{tpu_custom_call.1} parent=1 // pred_fallthru
      _
    // Predicated region
    $region30: #{tpu_custom_call.1} parent=1 // pred_check
      _
    $region31: #{tpu_custom_call.1} parent=1 // pred_check_branch
      %65 = sbr.rel (0) target = $region33
    $region32: #{tpu_custom_call.1} parent=1 // pred_region
      %66 = dma.done [#allocation6], 256
    $region33: #{tpu_custom_call.1} parent=1 // pred_fallthru
      _
    // Predicated region
    $region34: #{tpu_custom_call.1} parent=1 // pred_check
      _
    $region35: #{tpu_custom_call.1} parent=1 // pred_check_branch
      %68 = sbr.rel (0) target = $region37
    $region36: #{tpu_custom_call.1} parent=1 // pred_region
      %69 = dma.done [#allocation9], 16
    $region37: #{tpu_custom_call.1} parent=1 // pred_fallthru
      _
    %70 = sfence
    %s71 = sld [smem:[#allocation8]]
    %v72 = vstv %s71
    %s73 = sld [smem:[#allocation8 + $0x1]]
    %v74 = vstv %s73
    %s75 = sld [smem:[#allocation8 + $0x2]]
    %v76 = vstv %s75
    %v77 = vld [vmem:[%s0] sm:$0xff]
    %s78 = scalar_lea.vmem %s0, 8
    %v79 = vld [vmem:[%s78] sm:$0xff]
    %s80 = sld [smem:[#allocation2]]
    %v81 = vstv %s80
    %v82 = vmul.f32 %v77, %v81
    %s83 = sld [smem:[#allocation2 + $0x80]]
    %v84 = vstv %s83
    %v85 = vmul.f32 %v79, %v84
    %v86 = vadd.f32 %v82, %v85
    %s87 = sld [smem:[#allocation5]]
    %v88 = vstv %s87
    %v89 = vadd.f32 %v86, %v88
    %v90 = vmax.f32 %v89, 0.0
    %s91 = sld [smem:[#allocation7]]
    %v92 = vstv %s91
    %v93 = vmul.f32 %v90, %v92
    %v94 = vadd.f32 %v72, %v93
    %s95 = sld [smem:[#allocation7 + $0x1]]
    %v96 = vstv %s95
    %v97 = vmul.f32 %v90, %v96
    %v98 = vadd.f32 %v74, %v97
    %s99 = sld [smem:[#allocation7 + $0x2]]
    %v100 = vstv %s99
    %v101 = vmul.f32 %v90, %v100
    %v102 = vadd.f32 %v76, %v101
    %s103 = sld [smem:[#allocation2 + $0x1]]
    %v104 = vstv %s103
    %v105 = vmul.f32 %v77, %v104
    %s106 = sld [smem:[#allocation2 + $0x81]]
    %v107 = vstv %s106
    %v108 = vmul.f32 %v79, %v107
    %v109 = vadd.f32 %v105, %v108
    %s110 = sld [smem:[#allocation5 + $0x1]]
    %v111 = vstv %s110
    %v112 = vadd.f32 %v109, %v111
    %v113 = vmax.f32 %v112, 0.0
    %s114 = sld [smem:[#allocation7 + $0x80]]
    %v115 = vstv %s114
    %v116 = vmul.f32 %v113, %v115
    %v117 = vadd.f32 %v94, %v116
    %s118 = sld [smem:[#allocation7 + $0x81]]
    %v119 = vstv %s118
    %v120 = vmul.f32 %v113, %v119
    %v121 = vadd.f32 %v98, %v120
    %s122 = sld [smem:[#allocation7 + $0x82]]
    %v123 = vstv %s122
    %v124 = vmul.f32 %v113, %v123
    %v125 = vadd.f32 %v102, %v124
    %s126 = sld [smem:[#allocation2 + $0x2]]
    %v127 = vstv %s126
    %v128 = vmul.f32 %v77, %v127
    %s129 = sld [smem:[#allocation2 + $0x82]]
    %v130 = vstv %s129
    %v131 = vmul.f32 %v79, %v130
    %v132 = vadd.f32 %v128, %v131
    %s133 = sld [smem:[#allocation5 + $0x2]]
    %v134 = vstv %s133
    %v135 = vadd.f32 %v132, %v134
    %v136 = vmax.f32 %v135, 0.0
    %s137 = sld [smem:[#allocation7 + $0x100]]
    %v138 = vstv %s137
    %v139 = vmul.f32 %v136, %v138
    %v140 = vadd.f32 %v117, %v139
    %s141 = sld [smem:[#allocation7 + $0x101]]
    %v142 = vstv %s141
    %v143 = vmul.f32 %v136, %v142
    %v144 = vadd.f32 %v121, %v143
    %s145 = sld [smem:[#allocation7 + $0x102]]
    %v146 = vstv %s145
    %v147 = vmul.f32 %v136, %v146
    %v148 = vadd.f32 %v125, %v147
    %s149 = sld [smem:[#allocation2 + $0x3]]
    %v150 = vstv %s149
    %v151 = vmul.f32 %v77, %v150
    %s152 = sld [smem:[#allocation2 + $0x83]]
    %v153 = vstv %s152
    %v154 = vmul.f32 %v79, %v153
    %v155 = vadd.f32 %v151, %v154
    %s156 = sld [smem:[#allocation5 + $0x3]]
    %v157 = vstv %s156
    %v158 = vadd.f32 %v155, %v157
    %v159 = vmax.f32 %v158, 0.0
    %s160 = sld [smem:[#allocation7 + $0x180]]
    %v161 = vstv %s160
    %v162 = vmul.f32 %v159, %v161
    %v163 = vadd.f32 %v140, %v162
    %s164 = sld [smem:[#allocation7 + $0x181]]
    %v165 = vstv %s164
    %v166 = vmul.f32 %v159, %v165
    %v167 = vadd.f32 %v144, %v166
    %s168 = sld [smem:[#allocation7 + $0x182]]
    %v169 = vstv %s168
    %v170 = vmul.f32 %v159, %v169
    %v171 = vadd.f32 %v148, %v170
    %s172 = sld [smem:[#allocation2 + $0x4]]
    %v173 = vstv %s172
    %v174 = vmul.f32 %v77, %v173
    %s175 = sld [smem:[#allocation2 + $0x84]]
    %v176 = vstv %s175
    %v177 = vmul.f32 %v79, %v176
    %v178 = vadd.f32 %v174, %v177
    %s179 = sld [smem:[#allocation5 + $0x4]]
    %v180 = vstv %s179
    %v181 = vadd.f32 %v178, %v180
    %v182 = vmax.f32 %v181, 0.0
    %s183 = sld [smem:[#allocation7 + $0x200]]
    %v184 = vstv %s183
    %v185 = vmul.f32 %v182, %v184
    %v186 = vadd.f32 %v163, %v185
    %s187 = sld [smem:[#allocation7 + $0x201]]
    %v188 = vstv %s187
    %v189 = vmul.f32 %v182, %v188
    %v190 = vadd.f32 %v167, %v189
    %s191 = sld [smem:[#allocation7 + $0x202]]
    %v192 = vstv %s191
    %v193 = vmul.f32 %v182, %v192
    %v194 = vadd.f32 %v171, %v193
    %s195 = sld [smem:[#allocation2 + $0x5]]
    %v196 = vstv %s195
    %v197 = vmul.f32 %v77, %v196
    %s198 = sld [smem:[#allocation2 + $0x85]]
    %v199 = vstv %s198
    %v200 = vmul.f32 %v79, %v199
    %v201 = vadd.f32 %v197, %v200
    %s202 = sld [smem:[#allocation5 + $0x5]]
    %v203 = vstv %s202
    %v204 = vadd.f32 %v201, %v203
    %v205 = vmax.f32 %v204, 0.0
    %s206 = sld [smem:[#allocation7 + $0x280]]
    %v207 = vstv %s206
    %v208 = vmul.f32 %v205, %v207
    %v209 = vadd.f32 %v186, %v208
    %s210 = sld [smem:[#allocation7 + $0x281]]
    %v211 = vstv %s210
    %v212 = vmul.f32 %v205, %v211
    %v213 = vadd.f32 %v190, %v212
    %s214 = sld [smem:[#allocation7 + $0x282]]
    %v215 = vstv %s214
    %v216 = vmul.f32 %v205, %v215
    %v217 = vadd.f32 %v194, %v216
    %s218 = sld [smem:[#allocation2 + $0x6]]
    %v219 = vstv %s218
    %v220 = vmul.f32 %v77, %v219
    %s221 = sld [smem:[#allocation2 + $0x86]]
    %v222 = vstv %s221
    %v223 = vmul.f32 %v79, %v222
    %v224 = vadd.f32 %v220, %v223
    %s225 = sld [smem:[#allocation5 + $0x6]]
    %v226 = vstv %s225
    %v227 = vadd.f32 %v224, %v226
    %v228 = vmax.f32 %v227, 0.0
    %s229 = sld [smem:[#allocation7 + $0x300]]
    %v230 = vstv %s229
    %v231 = vmul.f32 %v228, %v230
    %v232 = vadd.f32 %v209, %v231
    %s233 = sld [smem:[#allocation7 + $0x301]]
    %v234 = vstv %s233
    %v235 = vmul.f32 %v228, %v234
    %v236 = vadd.f32 %v213, %v235
    %s237 = sld [smem:[#allocation7 + $0x302]]
    %v238 = vstv %s237
    %v239 = vmul.f32 %v228, %v238
    %v240 = vadd.f32 %v217, %v239
    %s241 = sld [smem:[#allocation2 + $0x7]]
    %v242 = vstv %s241
    %v243 = vmul.f32 %v77, %v242
    %s244 = sld [smem:[#allocation2 + $0x87]]
    %v245 = vstv %s244
    %v246 = vmul.f32 %v79, %v245
    %v247 = vadd.f32 %v243, %v246
    %s248 = sld [smem:[#allocation5 + $0x7]]
    %v249 = vstv %s248
    %v250 = vadd.f32 %v247, %v249
    %v251 = vmax.f32 %v250, 0.0
    %s252 = sld [smem:[#allocation7 + $0x380]]
    %v253 = vstv %s252
    %v254 = vmul.f32 %v251, %v253
    %v255 = vadd.f32 %v232, %v254
    %s256 = sld [smem:[#allocation7 + $0x381]]
    %v257 = vstv %s256
    %v258 = vmul.f32 %v251, %v257
    %v259 = vadd.f32 %v236, %v258
    %s260 = sld [smem:[#allocation7 + $0x382]]
    %v261 = vstv %s260
    %v262 = vmul.f32 %v251, %v261
    %v263 = vadd.f32 %v240, %v262
    %s264 = sld [smem:[#allocation2 + $0x8]]
    %v265 = vstv %s264
    %v266 = vmul.f32 %v77, %v265
    %s267 = sld [smem:[#allocation2 + $0x88]]
    %v268 = vstv %s267
    %v269 = vmul.f32 %v79, %v268
    %v270 = vadd.f32 %v266, %v269
    %s271 = sld [smem:[#allocation5 + $0x8]]
    %v272 = vstv %s271
    %v273 = vadd.f32 %v270, %v272
    %v274 = vmax.f32 %v273, 0.0
    %s275 = sld [smem:[#allocation7 + $0x400]]
    %v276 = vstv %s275
    %v277 = vmul.f32 %v274, %v276
    %v278 = vadd.f32 %v255, %v277
    %s279 = sld [smem:[#allocation7 + $0x401]]
    %v280 = vstv %s279
    %v281 = vmul.f32 %v274, %v280
    %v282 = vadd.f32 %v259, %v281
    %s283 = sld [smem:[#allocation7 + $0x402]]
    %v284 = vstv %s283
    %v285 = vmul.f32 %v274, %v284
    %v286 = vadd.f32 %v263, %v285
    %s287 = sld [smem:[#allocation2 + $0x9]]
    %v288 = vstv %s287
    %v289 = vmul.f32 %v77, %v288
    %s290 = sld [smem:[#allocation2 + $0x89]]
    %v291 = vstv %s290
    %v292 = vmul.f32 %v79, %v291
    %v293 = vadd.f32 %v289, %v292
    %s294 = sld [smem:[#allocation5 + $0x9]]
    %v295 = vstv %s294
    %v296 = vadd.f32 %v293, %v295
    %v297 = vmax.f32 %v296, 0.0
    %s298 = sld [smem:[#allocation7 + $0x480]]
    %v299 = vstv %s298
    %v300 = vmul.f32 %v297, %v299
    %v301 = vadd.f32 %v278, %v300
    %s302 = sld [smem:[#allocation7 + $0x481]]
    %v303 = vstv %s302
    %v304 = vmul.f32 %v297, %v303
    %v305 = vadd.f32 %v282, %v304
    %s306 = sld [smem:[#allocation7 + $0x482]]
    %v307 = vstv %s306
    %v308 = vmul.f32 %v297, %v307
    %v309 = vadd.f32 %v286, %v308
    %310 = vst [vmem:[#allocation10] sm:$0xff] %v301
    %s311 = scalar_lea.vmem [#allocation10], 8
    %312 = vst [vmem:[%s311] sm:$0xff] %v305
    %s313 = scalar_lea.vmem [#allocation10], 16
    %314 = vst [vmem:[%s313] sm:$0xff] %v309
    // Predicated region
    $region38: #{tpu_custom_call.1} parent=1 // pred_check
      _
    $region39: #{tpu_custom_call.1} parent=1 // pred_check_branch
      %316 = sbr.rel (0) target = $region41
    $region40: #{tpu_custom_call.1} parent=1 // pred_region
      %s318 = ssub.s32 384, 384
      %319 = vsyncadd [#allocation3], %s318
      %s320 = sshll.u32 [#allocation10], 4
      %s321 = int_to_ptr.vmem [resolvable:$true] %s320
      %326 = dma.vmem_to_hbm [thread:$0]  %s321, 384, %s5, [#allocation3], 128, 128, 8
    $region41: #{tpu_custom_call.1} parent=1 // pred_fallthru
      _
    // Predicated region
    $region42: #{tpu_custom_call.1} parent=1 // pred_check
      _
    $region43: #{tpu_custom_call.1} parent=1 // pred_check_branch
      %328 = sbr.rel (0) target = $region45
    $region44: #{tpu_custom_call.1} parent=1 // pred_region
      %329 = dma.done [#allocation3], 384
    $region45: #{tpu_custom_call.1} parent=1 // pred_fallthru
      _
    %330 = vsyncpa [#allocation3], 1
    %331 = vsyncpa [#allocation4], 1
    %332 = vsyncpa [#allocation6], 1
    %333 = vsyncpa [#allocation9], 1

</llo_original>
